<compile_context>
chip_gen: v7x
topology: tpu7x:2x2x1
jax: 0.10.0
libtpu: 0.0.40
codegen_flags: <defaults>
</compile_context>

<pallas_src>
import jax
import jax.numpy as jnp
from jax.experimental import pallas as pl
from jax.experimental.pallas import tpu as pltpu


def _sobel_loss_kernel(p_ref, g_ref, o_ref):
    # p_ref / g_ref : (TB, H, W) input planes (VMEM)
    # o_ref         : (TB, H, W) |sobel_x(pred-gt)| + |sobel_y(pred-gt)|
    TB, H, W = o_ref.shape
    f32 = jnp.float32

    # Conv is linear: form the difference image once.
    d = p_ref[...].astype(f32) - g_ref[...].astype(f32)

    # Zero-padded unit shifts along W (lane axis), built in registers:
    #   x_m1[., ., x] = d[., ., x-1] (0 at x==0)
    #   x_p1[., ., x] = d[., ., x+1] (0 at x==W-1)
    zcol = jnp.zeros((TB, H, 1), f32)
    x_m1 = jnp.concatenate([zcol, d[:, :, : W - 1]], axis=2)
    x_p1 = jnp.concatenate([d[:, :, 1:], zcol], axis=2)

    # Separable Sobel:
    #   kernelX = [1,2,1]^T (H)  ⊗ [1,0,-1] (W)
    #   kernelY = [1,0,-1]^T (H) ⊗ [1,2,1]  (W)
    h = x_m1 - x_p1              # horizontal difference  [1, 0, -1]
    v = x_m1 + 2.0 * d + x_p1    # horizontal smoothing   [1, 2,  1]

    # Zero-padded unit shifts along H (sublane axis) of the two intermediates.
    zrow = jnp.zeros((TB, 1, W), f32)
    h_m1 = jnp.concatenate([zrow, h[:, : H - 1, :]], axis=1)   # h[., y-1, .]
    h_p1 = jnp.concatenate([h[:, 1:, :], zrow], axis=1)        # h[., y+1, .]
    v_m1 = jnp.concatenate([zrow, v[:, : H - 1, :]], axis=1)
    v_p1 = jnp.concatenate([v[:, 1:, :], zrow], axis=1)

    sx = h_m1 + 2.0 * h + h_p1   # vertical smoothing of the W-difference
    sy = v_m1 - v_p1             # vertical difference of the W-smoothing

    o_ref[...] = (jnp.abs(sx) + jnp.abs(sy)).astype(o_ref.dtype)


def _vmem_capacity_bytes():
    """Physical VMEM of the current generation (fallback: v7x per-TC 64 MiB)."""
    try:
        info = pltpu.get_tpu_info()
        cap = getattr(info, "vmem_capacity_bytes", None)
        if cap:
            return int(cap)
    except Exception:
        pass
    return 64 << 20


def _pick_tb(B, H, W):
    """Planes per grid step.

    Budget against the real pipeline footprint (2x double-buffer x
    (2 inputs + 1 output) f32 blocks) and the generation's physical VMEM,
    cap each input block at ~8 MiB, and keep >= min(B, 8) grid steps so
    prefetch/writeback overlap compute on both v7x TensorCores.  No
    divisibility requirement: ragged last blocks are handled by Pallas and
    the computation is independent per plane.
    """
    plane_bytes = H * W * 4
    cap = _vmem_capacity_bytes()
    tb_vmem = max(1, (cap // 2) // (6 * plane_bytes))      # <= ~half of VMEM
    tb_mib = max(1, (8 << 20) // plane_bytes)               # <= ~8 MiB / input block
    tb_steps = pl.cdiv(B, min(B, 8))                        # >= min(B, 8) steps
    return max(1, min(B, tb_vmem, tb_mib, tb_steps))


def sobel_loss(pred, gt):
    """Pallas implementation of SOBEL.forward(pred, gt)."""
    N, C, H, W = pred.shape
    B = N * C
    p = pred.reshape(B, H, W)
    g = gt.reshape(B, H, W)

    TB = _pick_tb(B, H, W)
    grid = (pl.cdiv(B, TB),)

    cap = _vmem_capacity_bytes()
    vmem_limit = int(min((cap * 3) // 4, 96 << 20))   # 96 MiB on 128 MiB chips,
                                                      # 48 MiB on v7x's 64 MiB

    bytes_accessed = B * H * W * (p.dtype.itemsize + g.dtype.itemsize + 4)

    out = pl.pallas_call(
        _sobel_loss_kernel,
        out_shape=jax.ShapeDtypeStruct((B, H, W), jnp.float32),
        grid=grid,
        in_specs=[
            pl.BlockSpec((TB, H, W), lambda b: (b, 0, 0)),
            pl.BlockSpec((TB, H, W), lambda b: (b, 0, 0)),
        ],
        out_specs=pl.BlockSpec((TB, H, W), lambda b: (b, 0, 0)),
        compiler_params=pltpu.CompilerParams(
            dimension_semantics=("parallel",),
            vmem_limit_bytes=vmem_limit,
        ),
        cost_estimate=pl.CostEstimate(
            flops=16 * B * H * W,
            transcendentals=0,
            bytes_accessed=bytes_accessed,
        ),
    )(p, g)

    # Match PyTorch output shape: (N*C, 1, H, W)
    return out.reshape(B, 1, H, W)


def _reference(pred, gt):
    """Pure-JAX reference (same math) for a correctness check."""
    N, C, H, W = pred.shape
    B = N * C
    kx = jnp.array([[1.0, 0.0, -1.0],
                    [2.0, 0.0, -2.0],
                    [1.0, 0.0, -1.0]], jnp.float32)
    ky = kx.T

    def conv(x, k):
        xp = jnp.pad(x, ((0, 0), (1, 1), (1, 1)))
        acc = jnp.zeros((B, H, W), jnp.float32)
        for i in range(3):
            for j in range(3):
                acc = acc + k[i, j] * xp[:, i:i + H, j:j + W]
        return acc

    p = pred.reshape(B, H, W).astype(jnp.float32)
    g = gt.reshape(B, H, W).astype(jnp.float32)
    loss = jnp.abs(conv(p, kx) - conv(g, kx)) + jnp.abs(conv(p, ky) - conv(g, ky))
    return loss.reshape(B, 1, H, W)


if __name__ == "__main__":
    key = jax.random.PRNGKey(0)
    k1, k2 = jax.random.split(key)
    N, C, H, W = 2, 4, 16, 16
    pred = jax.random.normal(k1, (N, C, H, W), dtype=jnp.float32)
    gt = jax.random.normal(k2, (N, C, H, W), dtype=jnp.float32)

    out = jax.block_until_ready(sobel_loss(pred, gt))
    ref = jax.block_until_ready(_reference(pred, gt))

    assert out.shape == (N * C, 1, H, W)
    assert jnp.allclose(out, ref, atol=1e-5, rtol=1e-5)

    print("KERNEL_OK")
</pallas_src>

<mosaic_0001>
module attributes {stable_mosaic.version = 11 : i64} {
  func.func @_sobel_loss_kernel(%arg0: i32, %arg1: memref<1x16x16xf32, #tpu.memory_space<vmem>>, %arg2: memref<1x16x16xf32, #tpu.memory_space<vmem>>, %arg3: memref<1x16x16xf32, #tpu.memory_space<vmem>>) attributes {dimension_semantics = [#tpu.dimension_semantics<parallel>], iteration_bounds = array<i64: 8>, scalar_prefetch = 0 : i64, scratch_operands = 0 : i64, tpu.core_type = #tpu.core_type<tc>, window_params = [{transform_indices = @transform_0, window_bounds = array<i64: 1, 16, 16>}, {transform_indices = @transform_1, window_bounds = array<i64: 1, 16, 16>}, {transform_indices = @transform_2, window_bounds = array<i64: 1, 16, 16>}]} {
    %c0 = arith.constant 0 : index
    %c0_0 = arith.constant 0 : index
    %c0_1 = arith.constant 0 : index
    %0 = vector.load %arg1[%c0, %c0_0, %c0_1] : memref<1x16x16xf32, #tpu.memory_space<vmem>>, vector<1x16x16xf32>
    %c0_2 = arith.constant 0 : index
    %c0_3 = arith.constant 0 : index
    %c0_4 = arith.constant 0 : index
    %1 = vector.load %arg2[%c0_2, %c0_3, %c0_4] : memref<1x16x16xf32, #tpu.memory_space<vmem>>, vector<1x16x16xf32>
    %2 = arith.subf %0, %1 : vector<1x16x16xf32>
    %cst = arith.constant 0.000000e+00 : f32
    %3 = vector.broadcast %cst : f32 to vector<1x16x1xf32>
    %4 = vector.extract_strided_slice %2 {offsets = [0, 0, 0], sizes = [1, 16, 15], strides = [1, 1, 1]} : vector<1x16x16xf32> to vector<1x16x15xf32>
    %5 = tpu.concatenate %3, %4 in 2 : vector<1x16x1xf32>, vector<1x16x15xf32> -> vector<1x16x16xf32>
    %6 = vector.extract_strided_slice %2 {offsets = [0, 0, 1], sizes = [1, 16, 15], strides = [1, 1, 1]} : vector<1x16x16xf32> to vector<1x16x15xf32>
    %7 = tpu.concatenate %6, %3 in 2 : vector<1x16x15xf32>, vector<1x16x1xf32> -> vector<1x16x16xf32>
    %8 = arith.subf %5, %7 : vector<1x16x16xf32>
    %cst_5 = arith.constant 2.000000e+00 : f32
    %9 = vector.broadcast %cst_5 : f32 to vector<1x16x16xf32>
    %10 = arith.mulf %9, %2 : vector<1x16x16xf32>
    %11 = arith.addf %5, %10 : vector<1x16x16xf32>
    %12 = arith.addf %11, %7 : vector<1x16x16xf32>
    %cst_6 = arith.constant 0.000000e+00 : f32
    %13 = vector.broadcast %cst_6 : f32 to vector<1x1x16xf32>
    %14 = vector.extract_strided_slice %8 {offsets = [0, 0, 0], sizes = [1, 15, 16], strides = [1, 1, 1]} : vector<1x16x16xf32> to vector<1x15x16xf32>
    %15 = tpu.concatenate %13, %14 in 1 : vector<1x1x16xf32>, vector<1x15x16xf32> -> vector<1x16x16xf32>
    %16 = vector.extract_strided_slice %8 {offsets = [0, 1, 0], sizes = [1, 15, 16], strides = [1, 1, 1]} : vector<1x16x16xf32> to vector<1x15x16xf32>
    %17 = tpu.concatenate %16, %13 in 1 : vector<1x15x16xf32>, vector<1x1x16xf32> -> vector<1x16x16xf32>
    %18 = vector.extract_strided_slice %12 {offsets = [0, 0, 0], sizes = [1, 15, 16], strides = [1, 1, 1]} : vector<1x16x16xf32> to vector<1x15x16xf32>
    %19 = tpu.concatenate %13, %18 in 1 : vector<1x1x16xf32>, vector<1x15x16xf32> -> vector<1x16x16xf32>
    %20 = vector.extract_strided_slice %12 {offsets = [0, 1, 0], sizes = [1, 15, 16], strides = [1, 1, 1]} : vector<1x16x16xf32> to vector<1x15x16xf32>
    %21 = tpu.concatenate %20, %13 in 1 : vector<1x15x16xf32>, vector<1x1x16xf32> -> vector<1x16x16xf32>
    %cst_7 = arith.constant 2.000000e+00 : f32
    %22 = vector.broadcast %cst_7 : f32 to vector<1x16x16xf32>
    %23 = arith.mulf %22, %8 : vector<1x16x16xf32>
    %24 = arith.addf %15, %23 : vector<1x16x16xf32>
    %25 = arith.addf %24, %17 : vector<1x16x16xf32>
    %26 = arith.subf %19, %21 : vector<1x16x16xf32>
    %27 = math.absf %25 : vector<1x16x16xf32>
    %28 = math.absf %26 : vector<1x16x16xf32>
    %29 = arith.addf %27, %28 : vector<1x16x16xf32>
    %c0_8 = arith.constant 0 : index
    %c0_9 = arith.constant 0 : index
    %c0_10 = arith.constant 0 : index
    %30 = vector.load %arg3[%c0_8, %c0_9, %c0_10] : memref<1x16x16xf32, #tpu.memory_space<vmem>>, vector<1x16x16xf32>
    tpu.vector_store %arg3[%c0_8, %c0_9, %c0_10], %29 {strides = array<i32>} : memref<1x16x16xf32, #tpu.memory_space<vmem>>, vector<1x16x16xf32>,
    return
  }
  func.func @transform_0(%arg0: i32) -> (i32, i32, i32) {
    %c0_i32 = arith.constant 0 : i32
    %c0_i32_0 = arith.constant 0 : i32
    %c0_i32_1 = arith.constant 0 : i32
    return %arg0, %c0_i32, %c0_i32_0 : i32, i32, i32
  }
  func.func @transform_1(%arg0: i32) -> (i32, i32, i32) {
    %c0_i32 = arith.constant 0 : i32
    %c0_i32_0 = arith.constant 0 : i32
    %c0_i32_1 = arith.constant 0 : i32
    return %arg0, %c0_i32, %c0_i32_0 : i32, i32, i32
  }
  func.func @transform_2(%arg0: i32) -> (i32, i32, i32) {
    %c0_i32 = arith.constant 0 : i32
    %c0_i32_0 = arith.constant 0 : i32
    %c0_i32_1 = arith.constant 0 : i32
    return %arg0, %c0_i32, %c0_i32_0 : i32, i32, i32
  }
}

</mosaic_0001>

<llo_original>
// kernel: tpu_custom_call.1
$region0: #{tpu_custom_call.1}
  #allocation0 [shape = 'u32[]', space=smem, size = 0x4, offset = 0x4, fixed_abs, tag = 'smem constant byte address 0x4 - core index']
  #allocation1 [shape = 'u32[144,128]{1,0:T(1,128)}', space=vmem, size = 0x12000, scoped, tag = 'internal scratch']
  %s0 = inlined_call_operand.hbm [shape: f32[8,16,16], index: 0, kind: input, shape index: {}]
  %s1 = inlined_call_operand.hbm [shape: f32[8,16,16], index: 1, kind: input, shape index: {}]
  %s2 = inlined_call_operand.hbm [shape: f32[8,16,16], index: 2, kind: output, shape index: {}]
  %s3 = sld [smem:[#allocation0]]
  $region49: #{tpu_custom_call.1} parent=0
    _
  %s5 = ssub.s32 1, %s3
  %s6 = scalar_select 0, %s5, %s3
  $region1: #{tpu_custom_call.1} parent=0
    #allocation2 [shape = 'u8[16384]{0}', space=vmem, size = 0x4000, scoped, tag = 'input window, operand 0']
    #allocation3 [shape = 's32[2]{0}', space=sflag, size = 0x8, scoped, tag = 'scoped memory for tpu_custom_call.1']
    #allocation4 [shape = 's32[2]{0}', space=sflag, size = 0x8, scoped, tag = 'scoped memory for tpu_custom_call.1']
    #allocation5 [shape = 'u8[16384]{0}', space=vmem, size = 0x4000, scoped, tag = 'input window, operand 1']
    #allocation6 [shape = 's32[2]{0}', space=sflag, size = 0x8, scoped, tag = 'scoped memory for tpu_custom_call.1']
    #allocation7 [shape = 'u8[16384]{0}', space=vmem, size = 0x4000, scoped, tag = 'output window, operand 0']
    %7 = vsyncpa [#allocation3], 0
    %s8 = scalar_lea.sflag [#allocation3], 1
    %9 = vsyncpa %s8, 0
    %10 = vsyncpa [#allocation6], 0
    %s11 = scalar_lea.sflag [#allocation6], 1
    %12 = vsyncpa %s11, 0
    %13 = vsyncpa [#allocation4], 0
    %s14 = scalar_lea.sflag [#allocation4], 1
    %15 = vsyncpa %s14, 0
    loop: start=0, step=1, limit=10
    $region2: #{tpu_custom_call.1} parent=1 // loop_pre_header
      _
    $region3: #{tpu_custom_call.1} parent=1 // loop_header
      %s17 = sphi 0, %s21
      %p18 = scmp.ge.s32.totalorder %s17, 10
      %s27 = sphi 0, %s29
      %s30 = sphi 0, %s27
      %s31 = sphi 0, %s30
      %s47 = sphi 0, %s31
      %s53 = sphi 0, %s55
      %s56 = sphi 0, %s53
      %s57 = sphi 0, %s56
      %s73 = sphi 0, %s57
      %s79 = sphi 0, %s81
      %s82 = sphi 0, %s79
      %s83 = sphi 0, %s82
      %s99 = sphi 0, %s83
    $region4: #{tpu_custom_call.1} parent=1 // loop_header_branch
      %20 = sbr.rel (%p18) target = $region8
    $region5: #{tpu_custom_call.1} parent=1 // loop_body
      %s22 = ssub.s32 %s17, 1
      %s23 = ssub.s32 %s17, 2
      %s24 = sadd.s32 %s17, 1
      %s25 = ssub.s32 %s17, %s24
      %p26 = scmp.eq.s32.totalorder %s25, 0
      %s28 = sadd.s32 %s27, 1
      %s29 = scalar_select %p26, %s27, %s28
      %p32 = pneg %p26
      %p33 = scmp.eq.s32.totalorder %s17, 7
      %p34 = por %p32, %p33
      %p35 = scmp.ne.s32.totalorder %s27, %s30
      %p36 = scmp.eq.s32.totalorder %s17, 0
      %p37 = por %p35, %p36
      %p38 = scmp.ne.s32.totalorder %s27, %s30
      %p39 = scmp.eq.s32.totalorder %s22, 7
      %p40 = por %p38, %p39
      %p41 = scmp.ne.s32.totalorder %s30, %s31
      %p42 = scmp.eq.s32.totalorder %s22, 0
      %p43 = por %p41, %p42
      %p44 = scmp.ne.s32.totalorder %s30, %s31
      %p45 = scmp.eq.s32.totalorder %s23, 7
      %p46 = por %p44, %p45
      %p48 = scmp.ne.s32.totalorder %s31, %s47
      %p49 = scmp.eq.s32.totalorder %s23, 0
      %p50 = por %p48, %p49
      %s51 = ssub.s32 %s17, %s24
      %p52 = scmp.eq.s32.totalorder %s51, 0
      %s54 = sadd.s32 %s53, 1
      %s55 = scalar_select %p52, %s53, %s54
      %p58 = pneg %p52
      %p59 = scmp.eq.s32.totalorder %s17, 7
      %p60 = por %p58, %p59
      %p61 = scmp.ne.s32.totalorder %s53, %s56
      %p62 = scmp.eq.s32.totalorder %s17, 0
      %p63 = por %p61, %p62
      %p64 = scmp.ne.s32.totalorder %s53, %s56
      %p65 = scmp.eq.s32.totalorder %s22, 7
      %p66 = por %p64, %p65
      %p67 = scmp.ne.s32.totalorder %s56, %s57
      %p68 = scmp.eq.s32.totalorder %s22, 0
      %p69 = por %p67, %p68
      %p70 = scmp.ne.s32.totalorder %s56, %s57
      %p71 = scmp.eq.s32.totalorder %s23, 7
      %p72 = por %p70, %p71
      %p74 = scmp.ne.s32.totalorder %s57, %s73
      %p75 = scmp.eq.s32.totalorder %s23, 0
      %p76 = por %p74, %p75
      %s77 = ssub.s32 %s17, %s24
      %p78 = scmp.eq.s32.totalorder %s77, 0
      %s80 = sadd.s32 %s79, 1
      %s81 = scalar_select %p78, %s79, %s80
      %p84 = pneg %p78
      %p85 = scmp.eq.s32.totalorder %s17, 7
      %p86 = por %p84, %p85
      %p87 = scmp.ne.s32.totalorder %s79, %s82
      %p88 = scmp.eq.s32.totalorder %s17, 0
      %p89 = por %p87, %p88
      %p90 = scmp.ne.s32.totalorder %s79, %s82
      %p91 = scmp.eq.s32.totalorder %s22, 7
      %p92 = por %p90, %p91
      %p93 = scmp.ne.s32.totalorder %s82, %s83
      %p94 = scmp.eq.s32.totalorder %s22, 0
      %p95 = por %p93, %p94
      %p96 = scmp.ne.s32.totalorder %s82, %s83
      %p97 = scmp.eq.s32.totalorder %s23, 7
      %p98 = por %p96, %p97
      %p100 = scmp.ne.s32.totalorder %s83, %s99
      %p101 = scmp.eq.s32.totalorder %s23, 0
      %p102 = por %p100, %p101
      %p103 = scmp.le.s32.totalorder 1, %s17
      %p104 = scmp.lt.s32.totalorder %s17, 9
      %p105 = pnand %p103, %p104
      %p106 = pneg %p105
      // Predicated region
      $region9: #{tpu_custom_call.1} parent=5 // pred_check
        _
      $region10: #{tpu_custom_call.1} parent=5 // pred_check_branch
        %108 = sbr.rel (%p105) target = $region12
      $region11: #{tpu_custom_call.1} parent=5 // pred_region
        %s109 = ssub.s32 %s17, 1
      $region12: #{tpu_custom_call.1} parent=5 // pred_fallthru
        _
      %p110 = scmp.lt.s32.totalorder %s17, 8
      // Predicated region
      $region13: #{tpu_custom_call.1} parent=5 // pred_check
        %p111 = pneg %p110
      $region14: #{tpu_custom_call.1} parent=5 // pred_check_branch
        %113 = sbr.rel (%p111) target = $region16
      $region15: #{tpu_custom_call.1} parent=5 // pred_region
        // Predicated region
        $region17: #{tpu_custom_call.1} parent=15 // pred_check
          %p114 = pneg %p37
        $region18: #{tpu_custom_call.1} parent=15 // pred_check_branch
          %116 = sbr.rel (%p114) target = $region20
        $region19: #{tpu_custom_call.1} parent=15 // pred_region
          %s117 = sand.u32 %s27, 1
          %s118 = scalar_lea.sflag [#allocation3], %s117
          %s119 = sand.u32 %s27, 1
          %s120 = smul.addr %s119, 16
          %s121 = scalar_lea.vmem [#allocation2], %s120
          %s123 = ssub.s32 256, 256
          %124 = vsyncadd %s118, %s123
          %s125 = smul.addr %s17, 2
          %s126 = smul.addr %s125, 128
          %s127 = scalar_lea.hbm %s0, %s126
          %s128 = sshll.u32 %s121, 4
          %s129 = int_to_ptr.vmem [resolvable:$true] %s128
          %134 = dma.hbm_to_vmem [thread:$0]  %s127, 256, %s129, %s118, 128, 128, 8
        $region20: #{tpu_custom_call.1} parent=15 // pred_fallthru
          _
        // Predicated region
        $region21: #{tpu_custom_call.1} parent=15 // pred_check
          %p135 = pneg %p63
        $region22: #{tpu_custom_call.1} parent=15 // pred_check_branch
          %137 = sbr.rel (%p135) target = $region24
        $region23: #{tpu_custom_call.1} parent=15 // pred_region
          %s138 = sand.u32 %s53, 1
          %s139 = scalar_lea.sflag [#allocation6], %s138
          %s140 = sand.u32 %s53, 1
          %s141 = smul.addr %s140, 16
          %s142 = scalar_lea.vmem [#allocation5], %s141
          %s144 = ssub.s32 256, 256
          %145 = vsyncadd %s139, %s144
          %s146 = smul.addr %s17, 2
          %s147 = smul.addr %s146, 128
          %s148 = scalar_lea.hbm %s1, %s147
          %s149 = sshll.u32 %s142, 4
          %s150 = int_to_ptr.vmem [resolvable:$true] %s149
          %155 = dma.hbm_to_vmem [thread:$0]  %s148, 256, %s150, %s139, 128, 128, 8
        $region24: #{tpu_custom_call.1} parent=15 // pred_fallthru
          _
      $region16: #{tpu_custom_call.1} parent=5 // pred_fallthru
        _
      %p156 = scmp.le.s32.totalorder 1, %s17
      %p157 = scmp.lt.s32.totalorder %s17, 9
      %p158 = pnand %p156, %p157
      %p159 = pneg %p158
      // Predicated region
      $region25: #{tpu_custom_call.1} parent=5 // pred_check
        _
      $region26: #{tpu_custom_call.1} parent=5 // pred_check_branch
        %161 = sbr.rel (%p158) target = $region28
      $region27: #{tpu_custom_call.1} parent=5 // pred_region
        %s162 = ssub.s32 %s17, 1
        %s163 = sand.u32 %s30, 1
        %s164 = scalar_lea.sflag [#allocation3], %s163
        %s165 = sand.u32 %s30, 1
        %s166 = smul.addr %s165, 16
        %s167 = scalar_lea.vmem [#allocation2], %s166
        // Predicated region
        $region29: #{tpu_custom_call.1} parent=27 // pred_check
          %p168 = pneg %p43
        $region30: #{tpu_custom_call.1} parent=27 // pred_check_branch
          %170 = sbr.rel (%p168) target = $region32
        $region31: #{tpu_custom_call.1} parent=27 // pred_region
          %171 = dma.done %s164, 256
        $region32: #{tpu_custom_call.1} parent=27 // pred_fallthru
          _
        %s172 = sand.u32 %s56, 1
        %s173 = scalar_lea.sflag [#allocation6], %s172
        %s174 = sand.u32 %s56, 1
        %s175 = smul.addr %s174, 16
        %s176 = scalar_lea.vmem [#allocation5], %s175
        // Predicated region
        $region33: #{tpu_custom_call.1} parent=27 // pred_check
          %p177 = pneg %p69
        $region34: #{tpu_custom_call.1} parent=27 // pred_check_branch
          %179 = sbr.rel (%p177) target = $region36
        $region35: #{tpu_custom_call.1} parent=27 // pred_region
          %180 = dma.done %s173, 256
        $region36: #{tpu_custom_call.1} parent=27 // pred_fallthru
          _
        %s181 = sand.u32 %s30, 1
        %s182 = scalar_lea.sflag [#allocation3], %s181
        %s183 = sand.u32 %s30, 1
        %s184 = smul.addr %s183, 16
        %s185 = scalar_lea.vmem [#allocation2], %s184
        %p186 = pneg %p43
        %p187 = pneg %p40
        %s188 = sand.u32 %s56, 1
        %s189 = scalar_lea.sflag [#allocation6], %s188
        %s190 = sand.u32 %s56, 1
        %s191 = smul.addr %s190, 16
        %s192 = scalar_lea.vmem [#allocation5], %s191
        %p193 = pneg %p69
        %p194 = pneg %p66
        %p195 = pneg %p95
        %p196 = pneg %p92
        %s197 = sand.u32 %s82, 1
        %s198 = scalar_lea.sflag [#allocation4], %s197
        %s199 = sand.u32 %s82, 1
        %s200 = smul.addr %s199, 16
        %s201 = scalar_lea.vmem [#allocation7], %s200
        %v202 = vld [vmem:[%s167] sm:$0xff]
        %v203 = vld [vmem:[%s167 + $0x8] sm:$0xff]
        %v204 = vld [vmem:[%s176] sm:$0xff]
        %v205 = vld [vmem:[%s176 + $0x8] sm:$0xff]
        %v206 = vsub.f32 %v202, %v204
        %v207 = vsub.f32 %v203, %v205
        %210 = vrot.lane.b32.xlu0 %v206, 1
        %v211 = vpop.permute.xlu0 %210
        %212 = vrot.lane.b32.xlu0 %v207, 1
        %v213 = vpop.permute.xlu0 %212
        %vm216 = vcmask 7168
        %v217 = vsel %vm216, 0.0, %v211
        %v218 = vsel %vm216, 0.0, %v213
        %219 = vrot.lane.b32.xlu0 %v206, 127
        %v220 = vpop.permute.xlu0 %219
        %221 = vrot.lane.b32.xlu0 %v207, 127
        %v222 = vpop.permute.xlu0 %221
        %vm225 = vcmask 121856
        %v226 = vsel %vm225, %v220, 0.0
        %v227 = vsel %vm225, %v222, 0.0
        %v228 = vsub.f32 %v217, %v226
        %v229 = vsub.f32 %v218, %v227
        %v230 = vmul.f32 %v206, 2.0
        %v231 = vmul.f32 %v207, 2.0
        %v232 = vadd.f32 %v217, %v230
        %v233 = vadd.f32 %v218, %v231
        %v234 = vadd.f32 %v232, %v226
        %v235 = vadd.f32 %v233, %v227
        %vm238 = vcmask 1040384
        %v239 = vrot.slane %v228, 7
        %v240 = vrot.slane %v229, 7
        %v241 = vsel %vm238, %v239, %v240
        %v244 = vsel %vm238, 0.0, %v239
        %vm245 = vcmask 1046528
        %v246 = vrot.slane %v228, 1
        %v247 = vrot.slane %v229, 1
        %v248 = vsel %vm245, %v246, %v247
        %v251 = vsel %vm245, %v247, 0.0
        %v254 = vrot.slane %v234, 7
        %v255 = vrot.slane %v235, 7
        %v256 = vsel %vm238, %v254, %v255
        %v259 = vsel %vm238, 0.0, %v254
        %v260 = vrot.slane %v234, 1
        %v261 = vrot.slane %v235, 1
        %v262 = vsel %vm245, %v260, %v261
        %v265 = vsel %vm245, %v261, 0.0
        %v266 = vmul.f32 %v228, 2.0
        %v267 = vmul.f32 %v229, 2.0
        %v268 = vadd.f32 %v244, %v266
        %v269 = vadd.f32 %v241, %v267
        %v270 = vadd.f32 %v268, %v248
        %v271 = vadd.f32 %v269, %v251
        %v272 = vsub.f32 %v259, %v262
        %v273 = vsub.f32 %v256, %v265
        %v274 = vand.u32 2147483647, %v270
        %v275 = vand.u32 2147483647, %v271
        %v276 = vand.u32 2147483647, %v272
        %v277 = vand.u32 2147483647, %v273
        %v278 = vadd.f32 %v274, %v276
        %v279 = vadd.f32 %v275, %v277
        %vm280 = vcmask 130048
        %281 = vst.msk [vmem:[%s201] sm:$0xff] %vm280, %v278
        %282 = vst.msk [vmem:[%s201 + $0x8] sm:$0xff] %vm280, %v279
        %s283 = sand.u32 %s82, 1
        %s284 = scalar_lea.sflag [#allocation4], %s283
        %s285 = sand.u32 %s82, 1
        %s286 = smul.addr %s285, 16
        %s287 = scalar_lea.vmem [#allocation7], %s286
        // Predicated region
        $region37: #{tpu_custom_call.1} parent=27 // pred_check
          %p288 = pneg %p92
        $region38: #{tpu_custom_call.1} parent=27 // pred_check_branch
          %290 = sbr.rel (%p288) target = $region40
        $region39: #{tpu_custom_call.1} parent=27 // pred_region
          %s292 = ssub.s32 256, 256
          %293 = vsyncadd %s284, %s292
          %s294 = smul.addr %s22, 2
          %s295 = smul.addr %s294, 128
          %s296 = scalar_lea.hbm %s2, %s295
          %s297 = sshll.u32 %s287, 4
          %s298 = int_to_ptr.vmem [resolvable:$true] %s297
          %303 = dma.vmem_to_hbm [thread:$0]  %s298, 256, %s296, %s284, 128, 128, 8
        $region40: #{tpu_custom_call.1} parent=27 // pred_fallthru
          _
      $region28: #{tpu_custom_call.1} parent=5 // pred_fallthru
        _
      %p304 = scmp.le.s32.totalorder 2, %s17
      // Predicated region
      $region41: #{tpu_custom_call.1} parent=5 // pred_check
        %p305 = pneg %p304
      $region42: #{tpu_custom_call.1} parent=5 // pred_check_branch
        %307 = sbr.rel (%p305) target = $region44
      $region43: #{tpu_custom_call.1} parent=5 // pred_region
        %s308 = ssub.s32 %s17, 2
        // Predicated region
        $region45: #{tpu_custom_call.1} parent=43 // pred_check
          %p309 = pneg %p98
        $region46: #{tpu_custom_call.1} parent=43 // pred_check_branch
          %311 = sbr.rel (%p309) target = $region48
        $region47: #{tpu_custom_call.1} parent=43 // pred_region
          %s312 = sand.u32 %s83, 1
          %s313 = scalar_lea.sflag [#allocation4], %s312
          %s314 = sand.u32 %s83, 1
          %s315 = smul.addr %s314, 16
          %s316 = scalar_lea.vmem [#allocation7], %s315
          %317 = dma.done %s313, 256
        $region48: #{tpu_custom_call.1} parent=43 // pred_fallthru
          _
      $region44: #{tpu_custom_call.1} parent=5 // pred_fallthru
        _
    $region6: #{tpu_custom_call.1} parent=1 // loop_footer
      %s21 = sadd.s32 1, %s17
    $region7: #{tpu_custom_call.1} parent=1 // loop_footer_branch
      %16 = sbr.rel target = $region3
    $region8: #{tpu_custom_call.1} parent=1 // loop_exit
      _
    %318 = vsyncpa [#allocation3], 1
    %s319 = scalar_lea.sflag [#allocation3], 1
    %320 = vsyncpa %s319, 1
    %321 = vsyncpa [#allocation6], 1
    %s322 = scalar_lea.sflag [#allocation6], 1
    %323 = vsyncpa %s322, 1
    %324 = vsyncpa [#allocation4], 1
    %s325 = scalar_lea.sflag [#allocation4], 1
    %326 = vsyncpa %s325, 1

</llo_original>
